<compile_context>
chip_gen: v6e
topology: v6e:2x2x1
jax: 0.10.0
libtpu: 0.0.40
codegen_flags: <defaults>
</compile_context>

<pallas_src>
import functools

import jax
import jax.numpy as jnp
from jax import lax
from jax.experimental import pallas as pl
from jax.experimental.pallas import tpu as pltpu

_SUB, _LANE = 8, 128
_TILE = _SUB * _LANE  # 1024 batch elements per (8, 128) vreg tile


def _invariants_kernel(c_ref, l_ref, out_ref, *, K: int):
    # c_ref:   (bt, 9,   8, 128)  C components (row-major 3x3), batch on (sublane, lane)
    # l_ref:   (bt, K*9, 8, 128)  all K generators' components, same packing
    # out_ref: (bt, 2*K, 8, 128)  [t, 2k] = Igen_k, [t, 2k+1] = Jgen_k
    bt = c_ref.shape[0]

    def tile_body(t, carry):
        # Load the 9 C components of this (8,128) batch tile (only ~25 live vregs total).
        c = [c_ref[t, m] for m in range(9)]

        def C(i, j):
            return c[3 * i + j]

        # ---- batch-only work: once per tile, NOT once per generator ----
        # det(C) via closed-form 3x3 expansion.
        m00 = C(1, 1) * C(2, 2) - C(1, 2) * C(2, 1)
        m01 = C(1, 2) * C(2, 0) - C(1, 0) * C(2, 2)
        m02 = C(1, 0) * C(2, 1) - C(1, 1) * C(2, 0)
        detC = C(0, 0) * m00 + C(0, 1) * m01 + C(0, 2) * m02
        # Guard the zero-padded batch tail (det == 0 there); a truly singular C is
        # undefined in the reference module anyway.
        detC = jnp.where(detC != 0.0, detC, 1.0)

        # 1/det(C): approx reciprocal on the (idle) EUP + one Newton step for f32 accuracy.
        r = pl.reciprocal(detC, approx=True)
        inv_det = r * (2.0 - detC * r)

        # dC = det(C @ inv(C)^T) = det(cof(C)) / det(C)^2 = (detC * inv_det)^2
        # (identically 1 in exact arithmetic; kept explicit to follow the torch module,
        #  but without |C|^6-scale intermediates).
        s = detC * inv_det
        dC = s * s

        # ---- per-generator invariants ----
        for k in range(K):
            l = [l_ref[t, 9 * k + m] for m in range(9)]

            def L(i, j):
                return l[3 * i + j]

            # Igen = trace(C @ L) = sum_{i,j} C[i,j] * L[j,i]
            igen = C(0, 0) * L(0, 0)
            for i in range(3):
                for j in range(3):
                    if i == 0 and j == 0:
                        continue
                    igen = igen + C(i, j) * L(j, i)

            # Jgen = trace(dC * L) = dC * trace(L)
            jgen = dC * (L(0, 0) + L(1, 1) + L(2, 2))

            out_ref[t, 2 * k] = igen
            out_ref[t, 2 * k + 1] = jgen
        return carry

    lax.fori_loop(0, bt, tile_body, None)


def _pick_bt(nB: int, K: int) -> int:
    """Tiles per grid step: >= 8 grid steps when possible (pipelining + v7x megacore),
    padding bounded by bt-1 (< ~nB/8) tiles, VMEM footprint safe on all generations."""
    bt = max(1, min(16, -(-nB // 8)))
    # Double-buffered per-step footprint: (9 + 9K + 2K) tiles * 4 KiB * 2 buffers * bt.
    per_tile_bytes = (9 + 11 * K) * _TILE * 4 * 2
    bt = max(1, min(bt, (12 << 20) // per_tile_bytes))
    return bt


@jax.jit
def generalized_invariants(Lgen_, C_):
    """Lgen_: (B, K, 3, 3), C_: (B, 3, 3) -> IJ_: (B, K, 2) float32."""
    B, K, D1, D2 = Lgen_.shape
    assert (D1, D2) == (3, 3) and C_.shape == (B, 3, 3)
    f32 = jnp.float32

    nB = -(-B // _TILE)            # number of (8, 128) batch tiles
    bt = _pick_bt(nB, K)           # tiles per grid step
    steps = -(-nB // bt)
    nBp = steps * bt
    Bp = nBp * _TILE

    # ---- component-major packing, batch-tile outermost ----
    # TODO(synk): fuse this re-layout of Lgen_ into its upstream producer; as a standalone
    # op it is one extra HBM pass over Lgen_ (pad + transpose are kept under this jit so
    # only that single pass survives).
    c_flat = C_.reshape(B, 9).astype(f32)
    l_flat = Lgen_.reshape(B, 9 * K).astype(f32)
    pad = Bp - B
    if pad:
        c_flat = jnp.pad(c_flat, ((0, pad), (0, 0)))
        l_flat = jnp.pad(l_flat, ((0, pad), (0, 0)))
    c_packed = c_flat.reshape(nBp, _SUB, _LANE, 9).transpose(0, 3, 1, 2)        # (nBp, 9,   8, 128)
    l_packed = l_flat.reshape(nBp, _SUB, _LANE, 9 * K).transpose(0, 3, 1, 2)    # (nBp, K*9, 8, 128)
    # TODO(synk): reading Lgen_ as bfloat16 (f32 math in-kernel) would cut the dominant
    # HBM read term nearly in half; kept f32 to match the reference module's precision.

    out_packed = pl.pallas_call(
        functools.partial(_invariants_kernel, K=K),
        out_shape=jax.ShapeDtypeStruct((nBp, 2 * K, _SUB, _LANE), f32),
        grid=(steps,),
        in_specs=[
            pl.BlockSpec((bt, 9, _SUB, _LANE), lambda s: (s, 0, 0, 0)),
            pl.BlockSpec((bt, 9 * K, _SUB, _LANE), lambda s: (s, 0, 0, 0)),
        ],
        out_specs=pl.BlockSpec((bt, 2 * K, _SUB, _LANE), lambda s: (s, 0, 0, 0)),
        compiler_params=pltpu.CompilerParams(
            dimension_semantics=("parallel",),
        ),
        cost_estimate=pl.CostEstimate(
            flops=(20 * K + 40) * Bp,
            transcendentals=Bp,
            bytes_accessed=(9 + 11 * K) * 4 * Bp,
        ),
    )(c_packed, l_packed)

    # Unpack to the module's (B, K, 2) layout.
    # TODO(synk): downstream TPU consumers should take the packed (nBp, 2K, 8, 128) output
    # directly; this small-tensor transpose is two extra HBM passes kept only to match the
    # torch module's output layout.
    out = out_packed.transpose(0, 2, 3, 1).reshape(Bp, K, 2)
    return out[:B]


def _reference(Lgen_, C_):
    """Pure-JAX mirror of the torch module, for verification."""
    Cit = jnp.transpose(jnp.linalg.inv(C_), (0, 2, 1))
    dC = jnp.linalg.det(jnp.einsum("bij,bjk->bik", C_, Cit))          # (B,)
    I_ = jnp.einsum("bij,bkji->bk", C_, Lgen_)                        # (B, K)
    J_ = dC[:, None] * jnp.einsum("bkii->bk", Lgen_)                  # (B, K)
    return jnp.stack([I_, J_], axis=2)                                # (B, K, 2)


def _run_case(key, B, K):
    D = 3
    kc, kl = jax.random.split(key)
    # Well-conditioned SPD C (right Cauchy-Green-like tensors) + random generators.
    A = jax.random.normal(kc, (B, D, D), dtype=jnp.float32)
    C_ = jnp.einsum("bij,bkj->bik", A, A) + 0.5 * jnp.eye(D, dtype=jnp.float32)[None]
    Lgen_ = jax.random.normal(kl, (B, K, D, D), dtype=jnp.float32)

    IJ = jax.block_until_ready(generalized_invariants(Lgen_, C_))
    assert IJ.shape == (B, K, 2) and IJ.dtype == jnp.float32

    IJ_ref = _reference(Lgen_, C_)
    if not jnp.allclose(IJ, IJ_ref, atol=1e-3, rtol=1e-3):
        raise AssertionError(f"Pallas kernel mismatch vs JAX reference (B={B}, K={K})")


if __name__ == "__main__":
    key = jax.random.PRNGKey(0)
    k1, k2 = jax.random.split(key)
    _run_case(k1, B=8, K=4)       # tiny case (single tile, heavy padding path)
    _run_case(k2, B=2500, K=3)    # multi-grid-step case with partial last tile
    print("KERNEL_OK")
</pallas_src>

<mosaic_0001>
module attributes {stable_mosaic.version = 11 : i64} {
  func.func @_invariants_kernel(%arg0: i32, %arg1: memref<1x9x8x128xf32, #tpu.memory_space<vmem>>, %arg2: memref<1x36x8x128xf32, #tpu.memory_space<vmem>>, %arg3: memref<1x8x8x128xf32, #tpu.memory_space<vmem>>) attributes {dimension_semantics = [#tpu.dimension_semantics<parallel>], iteration_bounds = array<i64: 1>, scalar_prefetch = 0 : i64, scratch_operands = 0 : i64, tpu.core_type = #tpu.core_type<tc>, window_params = [{transform_indices = @transform_0, window_bounds = array<i64: 1, 9, 8, 128>}, {transform_indices = @transform_1, window_bounds = array<i64: 1, 36, 8, 128>}, {transform_indices = @transform_2, window_bounds = array<i64: 1, 8, 8, 128>}]} {
    %c0_i32 = arith.constant 0 : i32
    %0 = arith.index_cast %c0_i32 : i32 to index
    %c0 = arith.constant 0 : index
    %c0_0 = arith.constant 0 : index
    %c0_1 = arith.constant 0 : index
    %1 = vector.load %arg1[%0, %c0, %c0_0, %c0_1] : memref<1x9x8x128xf32, #tpu.memory_space<vmem>>, vector<1x1x8x128xf32>
    %2 = vector.shape_cast %1 : vector<1x1x8x128xf32> to vector<8x128xf32>
    %3 = arith.index_cast %c0_i32 : i32 to index
    %c1 = arith.constant 1 : index
    %c0_2 = arith.constant 0 : index
    %c0_3 = arith.constant 0 : index
    %4 = vector.load %arg1[%3, %c1, %c0_2, %c0_3] : memref<1x9x8x128xf32, #tpu.memory_space<vmem>>, vector<1x1x8x128xf32>
    %5 = vector.shape_cast %4 : vector<1x1x8x128xf32> to vector<8x128xf32>
    %6 = arith.index_cast %c0_i32 : i32 to index
    %c2 = arith.constant 2 : index
    %c0_4 = arith.constant 0 : index
    %c0_5 = arith.constant 0 : index
    %7 = vector.load %arg1[%6, %c2, %c0_4, %c0_5] : memref<1x9x8x128xf32, #tpu.memory_space<vmem>>, vector<1x1x8x128xf32>
    %8 = vector.shape_cast %7 : vector<1x1x8x128xf32> to vector<8x128xf32>
    %9 = arith.index_cast %c0_i32 : i32 to index
    %c3 = arith.constant 3 : index
    %c0_6 = arith.constant 0 : index
    %c0_7 = arith.constant 0 : index
    %10 = vector.load %arg1[%9, %c3, %c0_6, %c0_7] : memref<1x9x8x128xf32, #tpu.memory_space<vmem>>, vector<1x1x8x128xf32>
    %11 = vector.shape_cast %10 : vector<1x1x8x128xf32> to vector<8x128xf32>
    %12 = arith.index_cast %c0_i32 : i32 to index
    %c4 = arith.constant 4 : index
    %c0_8 = arith.constant 0 : index
    %c0_9 = arith.constant 0 : index
    %13 = vector.load %arg1[%12, %c4, %c0_8, %c0_9] : memref<1x9x8x128xf32, #tpu.memory_space<vmem>>, vector<1x1x8x128xf32>
    %14 = vector.shape_cast %13 : vector<1x1x8x128xf32> to vector<8x128xf32>
    %15 = arith.index_cast %c0_i32 : i32 to index
    %c5 = arith.constant 5 : index
    %c0_10 = arith.constant 0 : index
    %c0_11 = arith.constant 0 : index
    %16 = vector.load %arg1[%15, %c5, %c0_10, %c0_11] : memref<1x9x8x128xf32, #tpu.memory_space<vmem>>, vector<1x1x8x128xf32>
    %17 = vector.shape_cast %16 : vector<1x1x8x128xf32> to vector<8x128xf32>
    %18 = arith.index_cast %c0_i32 : i32 to index
    %c6 = arith.constant 6 : index
    %c0_12 = arith.constant 0 : index
    %c0_13 = arith.constant 0 : index
    %19 = vector.load %arg1[%18, %c6, %c0_12, %c0_13] : memref<1x9x8x128xf32, #tpu.memory_space<vmem>>, vector<1x1x8x128xf32>
    %20 = vector.shape_cast %19 : vector<1x1x8x128xf32> to vector<8x128xf32>
    %21 = arith.index_cast %c0_i32 : i32 to index
    %c7 = arith.constant 7 : index
    %c0_14 = arith.constant 0 : index
    %c0_15 = arith.constant 0 : index
    %22 = vector.load %arg1[%21, %c7, %c0_14, %c0_15] : memref<1x9x8x128xf32, #tpu.memory_space<vmem>>, vector<1x1x8x128xf32>
    %23 = vector.shape_cast %22 : vector<1x1x8x128xf32> to vector<8x128xf32>
    %24 = arith.index_cast %c0_i32 : i32 to index
    %c8 = arith.constant 8 : index
    %c0_16 = arith.constant 0 : index
    %c0_17 = arith.constant 0 : index
    %25 = vector.load %arg1[%24, %c8, %c0_16, %c0_17] : memref<1x9x8x128xf32, #tpu.memory_space<vmem>>, vector<1x1x8x128xf32>
    %26 = vector.shape_cast %25 : vector<1x1x8x128xf32> to vector<8x128xf32>
    %27 = arith.mulf %14, %26 : vector<8x128xf32>
    %28 = arith.mulf %17, %23 : vector<8x128xf32>
    %29 = arith.subf %27, %28 : vector<8x128xf32>
    %30 = arith.mulf %17, %20 : vector<8x128xf32>
    %31 = arith.mulf %11, %26 : vector<8x128xf32>
    %32 = arith.subf %30, %31 : vector<8x128xf32>
    %33 = arith.mulf %11, %23 : vector<8x128xf32>
    %34 = arith.mulf %14, %20 : vector<8x128xf32>
    %35 = arith.subf %33, %34 : vector<8x128xf32>
    %36 = arith.mulf %2, %29 : vector<8x128xf32>
    %37 = arith.mulf %5, %32 : vector<8x128xf32>
    %38 = arith.addf %36, %37 : vector<8x128xf32>
    %39 = arith.mulf %8, %35 : vector<8x128xf32>
    %40 = arith.addf %38, %39 : vector<8x128xf32>
    %cst = arith.constant 0.000000e+00 : f32
    %41 = vector.broadcast %cst : f32 to vector<8x128xf32>
    %42 = arith.cmpf one, %40, %41 : vector<8x128xf32>
    %cst_18 = arith.constant 1.000000e+00 : f32
    %43 = vector.broadcast %cst_18 : f32 to vector<8x128xf32>
    %44 = arith.select %42, %40, %43 : vector<8x128xi1>, vector<8x128xf32>
    %45 = tpu.reciprocal %44 {approx = true} : vector<8x128xf32> -> vector<8x128xf32>
    %46 = arith.mulf %44, %45 : vector<8x128xf32>
    %cst_19 = arith.constant 2.000000e+00 : f32
    %47 = vector.broadcast %cst_19 : f32 to vector<8x128xf32>
    %48 = arith.subf %47, %46 : vector<8x128xf32>
    %49 = arith.mulf %45, %48 : vector<8x128xf32>
    %50 = arith.mulf %44, %49 : vector<8x128xf32>
    %51 = arith.mulf %50, %50 : vector<8x128xf32>
    %52 = arith.index_cast %c0_i32 : i32 to index
    %c0_20 = arith.constant 0 : index
    %c0_21 = arith.constant 0 : index
    %c0_22 = arith.constant 0 : index
    %53 = vector.load %arg2[%52, %c0_20, %c0_21, %c0_22] : memref<1x36x8x128xf32, #tpu.memory_space<vmem>>, vector<1x1x8x128xf32>
    %54 = vector.shape_cast %53 : vector<1x1x8x128xf32> to vector<8x128xf32>
    %55 = arith.index_cast %c0_i32 : i32 to index
    %c1_23 = arith.constant 1 : index
    %c0_24 = arith.constant 0 : index
    %c0_25 = arith.constant 0 : index
    %56 = vector.load %arg2[%55, %c1_23, %c0_24, %c0_25] : memref<1x36x8x128xf32, #tpu.memory_space<vmem>>, vector<1x1x8x128xf32>
    %57 = vector.shape_cast %56 : vector<1x1x8x128xf32> to vector<8x128xf32>
    %58 = arith.index_cast %c0_i32 : i32 to index
    %c2_26 = arith.constant 2 : index
    %c0_27 = arith.constant 0 : index
    %c0_28 = arith.constant 0 : index
    %59 = vector.load %arg2[%58, %c2_26, %c0_27, %c0_28] : memref<1x36x8x128xf32, #tpu.memory_space<vmem>>, vector<1x1x8x128xf32>
    %60 = vector.shape_cast %59 : vector<1x1x8x128xf32> to vector<8x128xf32>
    %61 = arith.index_cast %c0_i32 : i32 to index
    %c3_29 = arith.constant 3 : index
    %c0_30 = arith.constant 0 : index
    %c0_31 = arith.constant 0 : index
    %62 = vector.load %arg2[%61, %c3_29, %c0_30, %c0_31] : memref<1x36x8x128xf32, #tpu.memory_space<vmem>>, vector<1x1x8x128xf32>
    %63 = vector.shape_cast %62 : vector<1x1x8x128xf32> to vector<8x128xf32>
    %64 = arith.index_cast %c0_i32 : i32 to index
    %c4_32 = arith.constant 4 : index
    %c0_33 = arith.constant 0 : index
    %c0_34 = arith.constant 0 : index
    %65 = vector.load %arg2[%64, %c4_32, %c0_33, %c0_34] : memref<1x36x8x128xf32, #tpu.memory_space<vmem>>, vector<1x1x8x128xf32>
    %66 = vector.shape_cast %65 : vector<1x1x8x128xf32> to vector<8x128xf32>
    %67 = arith.index_cast %c0_i32 : i32 to index
    %c5_35 = arith.constant 5 : index
    %c0_36 = arith.constant 0 : index
    %c0_37 = arith.constant 0 : index
    %68 = vector.load %arg2[%67, %c5_35, %c0_36, %c0_37] : memref<1x36x8x128xf32, #tpu.memory_space<vmem>>, vector<1x1x8x128xf32>
    %69 = vector.shape_cast %68 : vector<1x1x8x128xf32> to vector<8x128xf32>
    %70 = arith.index_cast %c0_i32 : i32 to index
    %c6_38 = arith.constant 6 : index
    %c0_39 = arith.constant 0 : index
    %c0_40 = arith.constant 0 : index
    %71 = vector.load %arg2[%70, %c6_38, %c0_39, %c0_40] : memref<1x36x8x128xf32, #tpu.memory_space<vmem>>, vector<1x1x8x128xf32>
    %72 = vector.shape_cast %71 : vector<1x1x8x128xf32> to vector<8x128xf32>
    %73 = arith.index_cast %c0_i32 : i32 to index
    %c7_41 = arith.constant 7 : index
    %c0_42 = arith.constant 0 : index
    %c0_43 = arith.constant 0 : index
    %74 = vector.load %arg2[%73, %c7_41, %c0_42, %c0_43] : memref<1x36x8x128xf32, #tpu.memory_space<vmem>>, vector<1x1x8x128xf32>
    %75 = vector.shape_cast %74 : vector<1x1x8x128xf32> to vector<8x128xf32>
    %76 = arith.index_cast %c0_i32 : i32 to index
    %c8_44 = arith.constant 8 : index
    %c0_45 = arith.constant 0 : index
    %c0_46 = arith.constant 0 : index
    %77 = vector.load %arg2[%76, %c8_44, %c0_45, %c0_46] : memref<1x36x8x128xf32, #tpu.memory_space<vmem>>, vector<1x1x8x128xf32>
    %78 = vector.shape_cast %77 : vector<1x1x8x128xf32> to vector<8x128xf32>
    %79 = arith.mulf %2, %54 : vector<8x128xf32>
    %80 = arith.mulf %5, %63 : vector<8x128xf32>
    %81 = arith.addf %79, %80 : vector<8x128xf32>
    %82 = arith.mulf %8, %72 : vector<8x128xf32>
    %83 = arith.addf %81, %82 : vector<8x128xf32>
    %84 = arith.mulf %11, %57 : vector<8x128xf32>
    %85 = arith.addf %83, %84 : vector<8x128xf32>
    %86 = arith.mulf %14, %66 : vector<8x128xf32>
    %87 = arith.addf %85, %86 : vector<8x128xf32>
    %88 = arith.mulf %17, %75 : vector<8x128xf32>
    %89 = arith.addf %87, %88 : vector<8x128xf32>
    %90 = arith.mulf %20, %60 : vector<8x128xf32>
    %91 = arith.addf %89, %90 : vector<8x128xf32>
    %92 = arith.mulf %23, %69 : vector<8x128xf32>
    %93 = arith.addf %91, %92 : vector<8x128xf32>
    %94 = arith.mulf %26, %78 : vector<8x128xf32>
    %95 = arith.addf %93, %94 : vector<8x128xf32>
    %96 = arith.addf %54, %66 : vector<8x128xf32>
    %97 = arith.addf %96, %78 : vector<8x128xf32>
    %98 = arith.mulf %51, %97 : vector<8x128xf32>
    %99 = arith.index_cast %c0_i32 : i32 to index
    %c0_47 = arith.constant 0 : index
    %c0_48 = arith.constant 0 : index
    %c0_49 = arith.constant 0 : index
    %100 = vector.load %arg3[%99, %c0_47, %c0_48, %c0_49] : memref<1x8x8x128xf32, #tpu.memory_space<vmem>>, vector<1x1x8x128xf32>
    %101 = vector.shape_cast %100 : vector<1x1x8x128xf32> to vector<8x128xf32>
    %102 = vector.shape_cast %95 : vector<8x128xf32> to vector<1x1x8x128xf32>
    tpu.vector_store %arg3[%99, %c0_47, %c0_48, %c0_49], %102 {strides = array<i32>} : memref<1x8x8x128xf32, #tpu.memory_space<vmem>>, vector<1x1x8x128xf32>,
    %103 = arith.index_cast %c0_i32 : i32 to index
    %c1_50 = arith.constant 1 : index
    %c0_51 = arith.constant 0 : index
    %c0_52 = arith.constant 0 : index
    %104 = vector.load %arg3[%103, %c1_50, %c0_51, %c0_52] : memref<1x8x8x128xf32, #tpu.memory_space<vmem>>, vector<1x1x8x128xf32>
    %105 = vector.shape_cast %104 : vector<1x1x8x128xf32> to vector<8x128xf32>
    %106 = vector.shape_cast %98 : vector<8x128xf32> to vector<1x1x8x128xf32>
    tpu.vector_store %arg3[%103, %c1_50, %c0_51, %c0_52], %106 {strides = array<i32>} : memref<1x8x8x128xf32, #tpu.memory_space<vmem>>, vector<1x1x8x128xf32>,
    %107 = arith.index_cast %c0_i32 : i32 to index
    %c9 = arith.constant 9 : index
    %c0_53 = arith.constant 0 : index
    %c0_54 = arith.constant 0 : index
    %108 = vector.load %arg2[%107, %c9, %c0_53, %c0_54] : memref<1x36x8x128xf32, #tpu.memory_space<vmem>>, vector<1x1x8x128xf32>
    %109 = vector.shape_cast %108 : vector<1x1x8x128xf32> to vector<8x128xf32>
    %110 = arith.index_cast %c0_i32 : i32 to index
    %c10 = arith.constant 10 : index
    %c0_55 = arith.constant 0 : index
    %c0_56 = arith.constant 0 : index
    %111 = vector.load %arg2[%110, %c10, %c0_55, %c0_56] : memref<1x36x8x128xf32, #tpu.memory_space<vmem>>, vector<1x1x8x128xf32>
    %112 = vector.shape_cast %111 : vector<1x1x8x128xf32> to vector<8x128xf32>
    %113 = arith.index_cast %c0_i32 : i32 to index
    %c11 = arith.constant 11 : index
    %c0_57 = arith.constant 0 : index
    %c0_58 = arith.constant 0 : index
    %114 = vector.load %arg2[%113, %c11, %c0_57, %c0_58] : memref<1x36x8x128xf32, #tpu.memory_space<vmem>>, vector<1x1x8x128xf32>
    %115 = vector.shape_cast %114 : vector<1x1x8x128xf32> to vector<8x128xf32>
    %116 = arith.index_cast %c0_i32 : i32 to index
    %c12 = arith.constant 12 : index
    %c0_59 = arith.constant 0 : index
    %c0_60 = arith.constant 0 : index
    %117 = vector.load %arg2[%116, %c12, %c0_59, %c0_60] : memref<1x36x8x128xf32, #tpu.memory_space<vmem>>, vector<1x1x8x128xf32>
    %118 = vector.shape_cast %117 : vector<1x1x8x128xf32> to vector<8x128xf32>
    %119 = arith.index_cast %c0_i32 : i32 to index
    %c13 = arith.constant 13 : index
    %c0_61 = arith.constant 0 : index
    %c0_62 = arith.constant 0 : index
    %120 = vector.load %arg2[%119, %c13, %c0_61, %c0_62] : memref<1x36x8x128xf32, #tpu.memory_space<vmem>>, vector<1x1x8x128xf32>
    %121 = vector.shape_cast %120 : vector<1x1x8x128xf32> to vector<8x128xf32>
    %122 = arith.index_cast %c0_i32 : i32 to index
    %c14 = arith.constant 14 : index
    %c0_63 = arith.constant 0 : index
    %c0_64 = arith.constant 0 : index
    %123 = vector.load %arg2[%122, %c14, %c0_63, %c0_64] : memref<1x36x8x128xf32, #tpu.memory_space<vmem>>, vector<1x1x8x128xf32>
    %124 = vector.shape_cast %123 : vector<1x1x8x128xf32> to vector<8x128xf32>
    %125 = arith.index_cast %c0_i32 : i32 to index
    %c15 = arith.constant 15 : index
    %c0_65 = arith.constant 0 : index
    %c0_66 = arith.constant 0 : index
    %126 = vector.load %arg2[%125, %c15, %c0_65, %c0_66] : memref<1x36x8x128xf32, #tpu.memory_space<vmem>>, vector<1x1x8x128xf32>
    %127 = vector.shape_cast %126 : vector<1x1x8x128xf32> to vector<8x128xf32>
    %128 = arith.index_cast %c0_i32 : i32 to index
    %c16 = arith.constant 16 : index
    %c0_67 = arith.constant 0 : index
    %c0_68 = arith.constant 0 : index
    %129 = vector.load %arg2[%128, %c16, %c0_67, %c0_68] : memref<1x36x8x128xf32, #tpu.memory_space<vmem>>, vector<1x1x8x128xf32>
    %130 = vector.shape_cast %129 : vector<1x1x8x128xf32> to vector<8x128xf32>
    %131 = arith.index_cast %c0_i32 : i32 to index
    %c17 = arith.constant 17 : index
    %c0_69 = arith.constant 0 : index
    %c0_70 = arith.constant 0 : index
    %132 = vector.load %arg2[%131, %c17, %c0_69, %c0_70] : memref<1x36x8x128xf32, #tpu.memory_space<vmem>>, vector<1x1x8x128xf32>
    %133 = vector.shape_cast %132 : vector<1x1x8x128xf32> to vector<8x128xf32>
    %134 = arith.mulf %2, %109 : vector<8x128xf32>
    %135 = arith.mulf %5, %118 : vector<8x128xf32>
    %136 = arith.addf %134, %135 : vector<8x128xf32>
    %137 = arith.mulf %8, %127 : vector<8x128xf32>
    %138 = arith.addf %136, %137 : vector<8x128xf32>
    %139 = arith.mulf %11, %112 : vector<8x128xf32>
    %140 = arith.addf %138, %139 : vector<8x128xf32>
    %141 = arith.mulf %14, %121 : vector<8x128xf32>
    %142 = arith.addf %140, %141 : vector<8x128xf32>
    %143 = arith.mulf %17, %130 : vector<8x128xf32>
    %144 = arith.addf %142, %143 : vector<8x128xf32>
    %145 = arith.mulf %20, %115 : vector<8x128xf32>
    %146 = arith.addf %144, %145 : vector<8x128xf32>
    %147 = arith.mulf %23, %124 : vector<8x128xf32>
    %148 = arith.addf %146, %147 : vector<8x128xf32>
    %149 = arith.mulf %26, %133 : vector<8x128xf32>
    %150 = arith.addf %148, %149 : vector<8x128xf32>
    %151 = arith.addf %109, %121 : vector<8x128xf32>
    %152 = arith.addf %151, %133 : vector<8x128xf32>
    %153 = arith.mulf %51, %152 : vector<8x128xf32>
    %154 = arith.index_cast %c0_i32 : i32 to index
    %c2_71 = arith.constant 2 : index
    %c0_72 = arith.constant 0 : index
    %c0_73 = arith.constant 0 : index
    %155 = vector.load %arg3[%154, %c2_71, %c0_72, %c0_73] : memref<1x8x8x128xf32, #tpu.memory_space<vmem>>, vector<1x1x8x128xf32>
    %156 = vector.shape_cast %155 : vector<1x1x8x128xf32> to vector<8x128xf32>
    %157 = vector.shape_cast %150 : vector<8x128xf32> to vector<1x1x8x128xf32>
    tpu.vector_store %arg3[%154, %c2_71, %c0_72, %c0_73], %157 {strides = array<i32>} : memref<1x8x8x128xf32, #tpu.memory_space<vmem>>, vector<1x1x8x128xf32>,
    %158 = arith.index_cast %c0_i32 : i32 to index
    %c3_74 = arith.constant 3 : index
    %c0_75 = arith.constant 0 : index
    %c0_76 = arith.constant 0 : index
    %159 = vector.load %arg3[%158, %c3_74, %c0_75, %c0_76] : memref<1x8x8x128xf32, #tpu.memory_space<vmem>>, vector<1x1x8x128xf32>
    %160 = vector.shape_cast %159 : vector<1x1x8x128xf32> to vector<8x128xf32>
    %161 = vector.shape_cast %153 : vector<8x128xf32> to vector<1x1x8x128xf32>
    tpu.vector_store %arg3[%158, %c3_74, %c0_75, %c0_76], %161 {strides = array<i32>} : memref<1x8x8x128xf32, #tpu.memory_space<vmem>>, vector<1x1x8x128xf32>,
    %162 = arith.index_cast %c0_i32 : i32 to index
    %c18 = arith.constant 18 : index
    %c0_77 = arith.constant 0 : index
    %c0_78 = arith.constant 0 : index
    %163 = vector.load %arg2[%162, %c18, %c0_77, %c0_78] : memref<1x36x8x128xf32, #tpu.memory_space<vmem>>, vector<1x1x8x128xf32>
    %164 = vector.shape_cast %163 : vector<1x1x8x128xf32> to vector<8x128xf32>
    %165 = arith.index_cast %c0_i32 : i32 to index
    %c19 = arith.constant 19 : index
    %c0_79 = arith.constant 0 : index
    %c0_80 = arith.constant 0 : index
    %166 = vector.load %arg2[%165, %c19, %c0_79, %c0_80] : memref<1x36x8x128xf32, #tpu.memory_space<vmem>>, vector<1x1x8x128xf32>
    %167 = vector.shape_cast %166 : vector<1x1x8x128xf32> to vector<8x128xf32>
    %168 = arith.index_cast %c0_i32 : i32 to index
    %c20 = arith.constant 20 : index
    %c0_81 = arith.constant 0 : index
    %c0_82 = arith.constant 0 : index
    %169 = vector.load %arg2[%168, %c20, %c0_81, %c0_82] : memref<1x36x8x128xf32, #tpu.memory_space<vmem>>, vector<1x1x8x128xf32>
    %170 = vector.shape_cast %169 : vector<1x1x8x128xf32> to vector<8x128xf32>
    %171 = arith.index_cast %c0_i32 : i32 to index
    %c21 = arith.constant 21 : index
    %c0_83 = arith.constant 0 : index
    %c0_84 = arith.constant 0 : index
    %172 = vector.load %arg2[%171, %c21, %c0_83, %c0_84] : memref<1x36x8x128xf32, #tpu.memory_space<vmem>>, vector<1x1x8x128xf32>
    %173 = vector.shape_cast %172 : vector<1x1x8x128xf32> to vector<8x128xf32>
    %174 = arith.index_cast %c0_i32 : i32 to index
    %c22 = arith.constant 22 : index
    %c0_85 = arith.constant 0 : index
    %c0_86 = arith.constant 0 : index
    %175 = vector.load %arg2[%174, %c22, %c0_85, %c0_86] : memref<1x36x8x128xf32, #tpu.memory_space<vmem>>, vector<1x1x8x128xf32>
    %176 = vector.shape_cast %175 : vector<1x1x8x128xf32> to vector<8x128xf32>
    %177 = arith.index_cast %c0_i32 : i32 to index
    %c23 = arith.constant 23 : index
    %c0_87 = arith.constant 0 : index
    %c0_88 = arith.constant 0 : index
    %178 = vector.load %arg2[%177, %c23, %c0_87, %c0_88] : memref<1x36x8x128xf32, #tpu.memory_space<vmem>>, vector<1x1x8x128xf32>
    %179 = vector.shape_cast %178 : vector<1x1x8x128xf32> to vector<8x128xf32>
    %180 = arith.index_cast %c0_i32 : i32 to index
    %c24 = arith.constant 24 : index
    %c0_89 = arith.constant 0 : index
    %c0_90 = arith.constant 0 : index
    %181 = vector.load %arg2[%180, %c24, %c0_89, %c0_90] : memref<1x36x8x128xf32, #tpu.memory_space<vmem>>, vector<1x1x8x128xf32>
    %182 = vector.shape_cast %181 : vector<1x1x8x128xf32> to vector<8x128xf32>
    %183 = arith.index_cast %c0_i32 : i32 to index
    %c25 = arith.constant 25 : index
    %c0_91 = arith.constant 0 : index
    %c0_92 = arith.constant 0 : index
    %184 = vector.load %arg2[%183, %c25, %c0_91, %c0_92] : memref<1x36x8x128xf32, #tpu.memory_space<vmem>>, vector<1x1x8x128xf32>
    %185 = vector.shape_cast %184 : vector<1x1x8x128xf32> to vector<8x128xf32>
    %186 = arith.index_cast %c0_i32 : i32 to index
    %c26 = arith.constant 26 : index
    %c0_93 = arith.constant 0 : index
    %c0_94 = arith.constant 0 : index
    %187 = vector.load %arg2[%186, %c26, %c0_93, %c0_94] : memref<1x36x8x128xf32, #tpu.memory_space<vmem>>, vector<1x1x8x128xf32>
    %188 = vector.shape_cast %187 : vector<1x1x8x128xf32> to vector<8x128xf32>
    %189 = arith.mulf %2, %164 : vector<8x128xf32>
    %190 = arith.mulf %5, %173 : vector<8x128xf32>
    %191 = arith.addf %189, %190 : vector<8x128xf32>
    %192 = arith.mulf %8, %182 : vector<8x128xf32>
    %193 = arith.addf %191, %192 : vector<8x128xf32>
    %194 = arith.mulf %11, %167 : vector<8x128xf32>
    %195 = arith.addf %193, %194 : vector<8x128xf32>
    %196 = arith.mulf %14, %176 : vector<8x128xf32>
    %197 = arith.addf %195, %196 : vector<8x128xf32>
    %198 = arith.mulf %17, %185 : vector<8x128xf32>
    %199 = arith.addf %197, %198 : vector<8x128xf32>
    %200 = arith.mulf %20, %170 : vector<8x128xf32>
    %201 = arith.addf %199, %200 : vector<8x128xf32>
    %202 = arith.mulf %23, %179 : vector<8x128xf32>
    %203 = arith.addf %201, %202 : vector<8x128xf32>
    %204 = arith.mulf %26, %188 : vector<8x128xf32>
    %205 = arith.addf %203, %204 : vector<8x128xf32>
    %206 = arith.addf %164, %176 : vector<8x128xf32>
    %207 = arith.addf %206, %188 : vector<8x128xf32>
    %208 = arith.mulf %51, %207 : vector<8x128xf32>
    %209 = arith.index_cast %c0_i32 : i32 to index
    %c4_95 = arith.constant 4 : index
    %c0_96 = arith.constant 0 : index
    %c0_97 = arith.constant 0 : index
    %210 = vector.load %arg3[%209, %c4_95, %c0_96, %c0_97] : memref<1x8x8x128xf32, #tpu.memory_space<vmem>>, vector<1x1x8x128xf32>
    %211 = vector.shape_cast %210 : vector<1x1x8x128xf32> to vector<8x128xf32>
    %212 = vector.shape_cast %205 : vector<8x128xf32> to vector<1x1x8x128xf32>
    tpu.vector_store %arg3[%209, %c4_95, %c0_96, %c0_97], %212 {strides = array<i32>} : memref<1x8x8x128xf32, #tpu.memory_space<vmem>>, vector<1x1x8x128xf32>,
    %213 = arith.index_cast %c0_i32 : i32 to index
    %c5_98 = arith.constant 5 : index
    %c0_99 = arith.constant 0 : index
    %c0_100 = arith.constant 0 : index
    %214 = vector.load %arg3[%213, %c5_98, %c0_99, %c0_100] : memref<1x8x8x128xf32, #tpu.memory_space<vmem>>, vector<1x1x8x128xf32>
    %215 = vector.shape_cast %214 : vector<1x1x8x128xf32> to vector<8x128xf32>
    %216 = vector.shape_cast %208 : vector<8x128xf32> to vector<1x1x8x128xf32>
    tpu.vector_store %arg3[%213, %c5_98, %c0_99, %c0_100], %216 {strides = array<i32>} : memref<1x8x8x128xf32, #tpu.memory_space<vmem>>, vector<1x1x8x128xf32>,
    %217 = arith.index_cast %c0_i32 : i32 to index
    %c27 = arith.constant 27 : index
    %c0_101 = arith.constant 0 : index
    %c0_102 = arith.constant 0 : index
    %218 = vector.load %arg2[%217, %c27, %c0_101, %c0_102] : memref<1x36x8x128xf32, #tpu.memory_space<vmem>>, vector<1x1x8x128xf32>
    %219 = vector.shape_cast %218 : vector<1x1x8x128xf32> to vector<8x128xf32>
    %220 = arith.index_cast %c0_i32 : i32 to index
    %c28 = arith.constant 28 : index
    %c0_103 = arith.constant 0 : index
    %c0_104 = arith.constant 0 : index
    %221 = vector.load %arg2[%220, %c28, %c0_103, %c0_104] : memref<1x36x8x128xf32, #tpu.memory_space<vmem>>, vector<1x1x8x128xf32>
    %222 = vector.shape_cast %221 : vector<1x1x8x128xf32> to vector<8x128xf32>
    %223 = arith.index_cast %c0_i32 : i32 to index
    %c29 = arith.constant 29 : index
    %c0_105 = arith.constant 0 : index
    %c0_106 = arith.constant 0 : index
    %224 = vector.load %arg2[%223, %c29, %c0_105, %c0_106] : memref<1x36x8x128xf32, #tpu.memory_space<vmem>>, vector<1x1x8x128xf32>
    %225 = vector.shape_cast %224 : vector<1x1x8x128xf32> to vector<8x128xf32>
    %226 = arith.index_cast %c0_i32 : i32 to index
    %c30 = arith.constant 30 : index
    %c0_107 = arith.constant 0 : index
    %c0_108 = arith.constant 0 : index
    %227 = vector.load %arg2[%226, %c30, %c0_107, %c0_108] : memref<1x36x8x128xf32, #tpu.memory_space<vmem>>, vector<1x1x8x128xf32>
    %228 = vector.shape_cast %227 : vector<1x1x8x128xf32> to vector<8x128xf32>
    %229 = arith.index_cast %c0_i32 : i32 to index
    %c31 = arith.constant 31 : index
    %c0_109 = arith.constant 0 : index
    %c0_110 = arith.constant 0 : index
    %230 = vector.load %arg2[%229, %c31, %c0_109, %c0_110] : memref<1x36x8x128xf32, #tpu.memory_space<vmem>>, vector<1x1x8x128xf32>
    %231 = vector.shape_cast %230 : vector<1x1x8x128xf32> to vector<8x128xf32>
    %232 = arith.index_cast %c0_i32 : i32 to index
    %c32 = arith.constant 32 : index
    %c0_111 = arith.constant 0 : index
    %c0_112 = arith.constant 0 : index
    %233 = vector.load %arg2[%232, %c32, %c0_111, %c0_112] : memref<1x36x8x128xf32, #tpu.memory_space<vmem>>, vector<1x1x8x128xf32>
    %234 = vector.shape_cast %233 : vector<1x1x8x128xf32> to vector<8x128xf32>
    %235 = arith.index_cast %c0_i32 : i32 to index
    %c33 = arith.constant 33 : index
    %c0_113 = arith.constant 0 : index
    %c0_114 = arith.constant 0 : index
    %236 = vector.load %arg2[%235, %c33, %c0_113, %c0_114] : memref<1x36x8x128xf32, #tpu.memory_space<vmem>>, vector<1x1x8x128xf32>
    %237 = vector.shape_cast %236 : vector<1x1x8x128xf32> to vector<8x128xf32>
    %238 = arith.index_cast %c0_i32 : i32 to index
    %c34 = arith.constant 34 : index
    %c0_115 = arith.constant 0 : index
    %c0_116 = arith.constant 0 : index
    %239 = vector.load %arg2[%238, %c34, %c0_115, %c0_116] : memref<1x36x8x128xf32, #tpu.memory_space<vmem>>, vector<1x1x8x128xf32>
    %240 = vector.shape_cast %239 : vector<1x1x8x128xf32> to vector<8x128xf32>
    %241 = arith.index_cast %c0_i32 : i32 to index
    %c35 = arith.constant 35 : index
    %c0_117 = arith.constant 0 : index
    %c0_118 = arith.constant 0 : index
    %242 = vector.load %arg2[%241, %c35, %c0_117, %c0_118] : memref<1x36x8x128xf32, #tpu.memory_space<vmem>>, vector<1x1x8x128xf32>
    %243 = vector.shape_cast %242 : vector<1x1x8x128xf32> to vector<8x128xf32>
    %244 = arith.mulf %2, %219 : vector<8x128xf32>
    %245 = arith.mulf %5, %228 : vector<8x128xf32>
    %246 = arith.addf %244, %245 : vector<8x128xf32>
    %247 = arith.mulf %8, %237 : vector<8x128xf32>
    %248 = arith.addf %246, %247 : vector<8x128xf32>
    %249 = arith.mulf %11, %222 : vector<8x128xf32>
    %250 = arith.addf %248, %249 : vector<8x128xf32>
    %251 = arith.mulf %14, %231 : vector<8x128xf32>
    %252 = arith.addf %250, %251 : vector<8x128xf32>
    %253 = arith.mulf %17, %240 : vector<8x128xf32>
    %254 = arith.addf %252, %253 : vector<8x128xf32>
    %255 = arith.mulf %20, %225 : vector<8x128xf32>
    %256 = arith.addf %254, %255 : vector<8x128xf32>
    %257 = arith.mulf %23, %234 : vector<8x128xf32>
    %258 = arith.addf %256, %257 : vector<8x128xf32>
    %259 = arith.mulf %26, %243 : vector<8x128xf32>
    %260 = arith.addf %258, %259 : vector<8x128xf32>
    %261 = arith.addf %219, %231 : vector<8x128xf32>
    %262 = arith.addf %261, %243 : vector<8x128xf32>
    %263 = arith.mulf %51, %262 : vector<8x128xf32>
    %264 = arith.index_cast %c0_i32 : i32 to index
    %c6_119 = arith.constant 6 : index
    %c0_120 = arith.constant 0 : index
    %c0_121 = arith.constant 0 : index
    %265 = vector.load %arg3[%264, %c6_119, %c0_120, %c0_121] : memref<1x8x8x128xf32, #tpu.memory_space<vmem>>, vector<1x1x8x128xf32>
    %266 = vector.shape_cast %265 : vector<1x1x8x128xf32> to vector<8x128xf32>
    %267 = vector.shape_cast %260 : vector<8x128xf32> to vector<1x1x8x128xf32>
    tpu.vector_store %arg3[%264, %c6_119, %c0_120, %c0_121], %267 {strides = array<i32>} : memref<1x8x8x128xf32, #tpu.memory_space<vmem>>, vector<1x1x8x128xf32>,
    %268 = arith.index_cast %c0_i32 : i32 to index
    %c7_122 = arith.constant 7 : index
    %c0_123 = arith.constant 0 : index
    %c0_124 = arith.constant 0 : index
    %269 = vector.load %arg3[%268, %c7_122, %c0_123, %c0_124] : memref<1x8x8x128xf32, #tpu.memory_space<vmem>>, vector<1x1x8x128xf32>
    %270 = vector.shape_cast %269 : vector<1x1x8x128xf32> to vector<8x128xf32>
    %271 = vector.shape_cast %263 : vector<8x128xf32> to vector<1x1x8x128xf32>
    tpu.vector_store %arg3[%268, %c7_122, %c0_123, %c0_124], %271 {strides = array<i32>} : memref<1x8x8x128xf32, #tpu.memory_space<vmem>>, vector<1x1x8x128xf32>,
    %c1_i32 = arith.constant 1 : i32
    return
  }
  func.func @transform_0(%arg0: i32) -> (i32, i32, i32, i32) {
    %c0_i32 = arith.constant 0 : i32
    %c0_i32_0 = arith.constant 0 : i32
    %c0_i32_1 = arith.constant 0 : i32
    %c0_i32_2 = arith.constant 0 : i32
    return %arg0, %c0_i32, %c0_i32_0, %c0_i32_1 : i32, i32, i32, i32
  }
  func.func @transform_1(%arg0: i32) -> (i32, i32, i32, i32) {
    %c0_i32 = arith.constant 0 : i32
    %c0_i32_0 = arith.constant 0 : i32
    %c0_i32_1 = arith.constant 0 : i32
    %c0_i32_2 = arith.constant 0 : i32
    return %arg0, %c0_i32, %c0_i32_0, %c0_i32_1 : i32, i32, i32, i32
  }
  func.func @transform_2(%arg0: i32) -> (i32, i32, i32, i32) {
    %c0_i32 = arith.constant 0 : i32
    %c0_i32_0 = arith.constant 0 : i32
    %c0_i32_1 = arith.constant 0 : i32
    %c0_i32_2 = arith.constant 0 : i32
    return %arg0, %c0_i32, %c0_i32_0, %c0_i32_1 : i32, i32, i32, i32
  }
}

</mosaic_0001>

<llo_original>
// kernel: generalized_invariants.1
$region0: #{generalized_invariants.1}
  #allocation0 [shape = 'u32[]', space=smem, size = 0x4, offset = 0x4, fixed_abs, tag = 'smem constant byte address 0x4 - core index']
  #allocation1 [shape = 'u32[144,128]{1,0:T(1,128)}', space=vmem, size = 0x12000, scoped, tag = 'internal scratch']
  %s0 = inlined_call_operand.vmem [shape: f32[1,9,8,128], index: 0, kind: input, shape index: {}]
  %s1 = inlined_call_operand.vmem [shape: f32[1,36,8,128], index: 1, kind: input, shape index: {}]
  %s2 = inlined_call_operand.vmem [shape: f32[1,8,8,128], index: 2, kind: output, shape index: {}]
  %s3 = sld [smem:[#allocation0]]
  $region18: #{generalized_invariants.1} parent=0
    _
  %s5 = ssub.s32 1, %s3
  %s6 = scalar_select 0, %s5, %s3
  // Predicated region
  $region2: #{generalized_invariants.1} parent=0 // pred_check
    _
  $region3: #{generalized_invariants.1} parent=0 // pred_check_branch
    %8 = sbr.rel (0) target = $region5
  $region4: #{generalized_invariants.1} parent=0 // pred_region
    _
  $region5: #{generalized_invariants.1} parent=0 // pred_fallthru
    _
  // Predicated region
  $region6: #{generalized_invariants.1} parent=0 // pred_check
    _
  $region7: #{generalized_invariants.1} parent=0 // pred_check_branch
    %10 = sbr.rel (0) target = $region9
  $region8: #{generalized_invariants.1} parent=0 // pred_region
    _
  $region9: #{generalized_invariants.1} parent=0 // pred_fallthru
    _
  %v11 = vld [vmem:[%s0] sm:$0xff]
  %s12 = scalar_lea.vmem %s0, 8
  %v13 = vld [vmem:[%s12] sm:$0xff]
  %s14 = scalar_lea.vmem %s0, 16
  %v15 = vld [vmem:[%s14] sm:$0xff]
  %s16 = scalar_lea.vmem %s0, 24
  %v17 = vld [vmem:[%s16] sm:$0xff]
  %s18 = scalar_lea.vmem %s0, 32
  %v19 = vld [vmem:[%s18] sm:$0xff]
  %s20 = scalar_lea.vmem %s0, 40
  %v21 = vld [vmem:[%s20] sm:$0xff]
  %s22 = scalar_lea.vmem %s0, 48
  %v23 = vld [vmem:[%s22] sm:$0xff]
  %s24 = scalar_lea.vmem %s0, 56
  %v25 = vld [vmem:[%s24] sm:$0xff]
  %s26 = scalar_lea.vmem %s0, 64
  %v27 = vld [vmem:[%s26] sm:$0xff]
  %v28 = vmul.f32 %v19, %v27
  %v29 = vmul.f32 %v21, %v25
  %v30 = vsub.f32 %v28, %v29
  %v31 = vmul.f32 %v21, %v23
  %v32 = vmul.f32 %v17, %v27
  %v33 = vsub.f32 %v31, %v32
  %v34 = vmul.f32 %v17, %v25
  %v35 = vmul.f32 %v19, %v23
  %v36 = vsub.f32 %v34, %v35
  %v37 = vmul.f32 %v11, %v30
  %v38 = vmul.f32 %v13, %v33
  %v39 = vadd.f32 %v37, %v38
  %v40 = vmul.f32 %v15, %v36
  %v41 = vadd.f32 %v39, %v40
  %vm42 = vcmp.ne.f32.partialorder %v41, 0.0
  %v43 = vsel %vm42, %v41, 1.0
  %v44 = vrcp.pop %v43
  %v45 = vmul.f32 %v43, %v44
  %v46 = vsub.f32 2.0, %v45
  %v47 = vmul.f32 %v44, %v46
  %v48 = vmul.f32 %v43, %v47
  %v49 = vmul.f32 %v48, %v48
  %v50 = vld [vmem:[%s1] sm:$0xff]
  %s51 = scalar_lea.vmem %s1, 8
  %v52 = vld [vmem:[%s51] sm:$0xff]
  %s53 = scalar_lea.vmem %s1, 16
  %v54 = vld [vmem:[%s53] sm:$0xff]
  %s55 = scalar_lea.vmem %s1, 24
  %v56 = vld [vmem:[%s55] sm:$0xff]
  %s57 = scalar_lea.vmem %s1, 32
  %v58 = vld [vmem:[%s57] sm:$0xff]
  %s59 = scalar_lea.vmem %s1, 40
  %v60 = vld [vmem:[%s59] sm:$0xff]
  %s61 = scalar_lea.vmem %s1, 48
  %v62 = vld [vmem:[%s61] sm:$0xff]
  %s63 = scalar_lea.vmem %s1, 56
  %v64 = vld [vmem:[%s63] sm:$0xff]
  %s65 = scalar_lea.vmem %s1, 64
  %v66 = vld [vmem:[%s65] sm:$0xff]
  %v67 = vmul.f32 %v11, %v50
  %v68 = vmul.f32 %v13, %v56
  %v69 = vadd.f32 %v67, %v68
  %v70 = vmul.f32 %v15, %v62
  %v71 = vadd.f32 %v69, %v70
  %v72 = vmul.f32 %v17, %v52
  %v73 = vadd.f32 %v71, %v72
  %v74 = vmul.f32 %v19, %v58
  %v75 = vadd.f32 %v73, %v74
  %v76 = vmul.f32 %v21, %v64
  %v77 = vadd.f32 %v75, %v76
  %v78 = vmul.f32 %v23, %v54
  %v79 = vadd.f32 %v77, %v78
  %v80 = vmul.f32 %v25, %v60
  %v81 = vadd.f32 %v79, %v80
  %v82 = vmul.f32 %v27, %v66
  %v83 = vadd.f32 %v81, %v82
  %v84 = vadd.f32 %v50, %v58
  %v85 = vadd.f32 %v84, %v66
  %v86 = vmul.f32 %v49, %v85
  %87 = vst [vmem:[%s2] sm:$0xff] %v83
  %s88 = scalar_lea.vmem %s2, 8
  %89 = vst [vmem:[%s88] sm:$0xff] %v86
  %s90 = scalar_lea.vmem %s1, 72
  %v91 = vld [vmem:[%s90] sm:$0xff]
  %s92 = scalar_lea.vmem %s1, 80
  %v93 = vld [vmem:[%s92] sm:$0xff]
  %s94 = scalar_lea.vmem %s1, 88
  %v95 = vld [vmem:[%s94] sm:$0xff]
  %s96 = scalar_lea.vmem %s1, 96
  %v97 = vld [vmem:[%s96] sm:$0xff]
  %s98 = scalar_lea.vmem %s1, 104
  %v99 = vld [vmem:[%s98] sm:$0xff]
  %s100 = scalar_lea.vmem %s1, 112
  %v101 = vld [vmem:[%s100] sm:$0xff]
  %s102 = scalar_lea.vmem %s1, 120
  %v103 = vld [vmem:[%s102] sm:$0xff]
  %s104 = scalar_lea.vmem %s1, 128
  %v105 = vld [vmem:[%s104] sm:$0xff]
  %s106 = scalar_lea.vmem %s1, 136
  %v107 = vld [vmem:[%s106] sm:$0xff]
  %v108 = vmul.f32 %v11, %v91
  %v109 = vmul.f32 %v13, %v97
  %v110 = vadd.f32 %v108, %v109
  %v111 = vmul.f32 %v15, %v103
  %v112 = vadd.f32 %v110, %v111
  %v113 = vmul.f32 %v17, %v93
  %v114 = vadd.f32 %v112, %v113
  %v115 = vmul.f32 %v19, %v99
  %v116 = vadd.f32 %v114, %v115
  %v117 = vmul.f32 %v21, %v105
  %v118 = vadd.f32 %v116, %v117
  %v119 = vmul.f32 %v23, %v95
  %v120 = vadd.f32 %v118, %v119
  %v121 = vmul.f32 %v25, %v101
  %v122 = vadd.f32 %v120, %v121
  %v123 = vmul.f32 %v27, %v107
  %v124 = vadd.f32 %v122, %v123
  %v125 = vadd.f32 %v91, %v99
  %v126 = vadd.f32 %v125, %v107
  %v127 = vmul.f32 %v49, %v126
  %s128 = scalar_lea.vmem %s2, 16
  %129 = vst [vmem:[%s128] sm:$0xff] %v124
  %s130 = scalar_lea.vmem %s2, 24
  %131 = vst [vmem:[%s130] sm:$0xff] %v127
  %s132 = scalar_lea.vmem %s1, 144
  %v133 = vld [vmem:[%s132] sm:$0xff]
  %s134 = scalar_lea.vmem %s1, 152
  %v135 = vld [vmem:[%s134] sm:$0xff]
  %s136 = scalar_lea.vmem %s1, 160
  %v137 = vld [vmem:[%s136] sm:$0xff]
  %s138 = scalar_lea.vmem %s1, 168
  %v139 = vld [vmem:[%s138] sm:$0xff]
  %s140 = scalar_lea.vmem %s1, 176
  %v141 = vld [vmem:[%s140] sm:$0xff]
  %s142 = scalar_lea.vmem %s1, 184
  %v143 = vld [vmem:[%s142] sm:$0xff]
  %s144 = scalar_lea.vmem %s1, 192
  %v145 = vld [vmem:[%s144] sm:$0xff]
  %s146 = scalar_lea.vmem %s1, 200
  %v147 = vld [vmem:[%s146] sm:$0xff]
  %s148 = scalar_lea.vmem %s1, 208
  %v149 = vld [vmem:[%s148] sm:$0xff]
  %v150 = vmul.f32 %v11, %v133
  %v151 = vmul.f32 %v13, %v139
  %v152 = vadd.f32 %v150, %v151
  %v153 = vmul.f32 %v15, %v145
  %v154 = vadd.f32 %v152, %v153
  %v155 = vmul.f32 %v17, %v135
  %v156 = vadd.f32 %v154, %v155
  %v157 = vmul.f32 %v19, %v141
  %v158 = vadd.f32 %v156, %v157
  %v159 = vmul.f32 %v21, %v147
  %v160 = vadd.f32 %v158, %v159
  %v161 = vmul.f32 %v23, %v137
  %v162 = vadd.f32 %v160, %v161
  %v163 = vmul.f32 %v25, %v143
  %v164 = vadd.f32 %v162, %v163
  %v165 = vmul.f32 %v27, %v149
  %v166 = vadd.f32 %v164, %v165
  %v167 = vadd.f32 %v133, %v141
  %v168 = vadd.f32 %v167, %v149
  %v169 = vmul.f32 %v49, %v168
  %s170 = scalar_lea.vmem %s2, 32
  %171 = vst [vmem:[%s170] sm:$0xff] %v166
  %s172 = scalar_lea.vmem %s2, 40
  %173 = vst [vmem:[%s172] sm:$0xff] %v169
  %s174 = scalar_lea.vmem %s1, 216
  %v175 = vld [vmem:[%s174] sm:$0xff]
  %s176 = scalar_lea.vmem %s1, 224
  %v177 = vld [vmem:[%s176] sm:$0xff]
  %s178 = scalar_lea.vmem %s1, 232
  %v179 = vld [vmem:[%s178] sm:$0xff]
  %s180 = scalar_lea.vmem %s1, 240
  %v181 = vld [vmem:[%s180] sm:$0xff]
  %s182 = scalar_lea.vmem %s1, 248
  %v183 = vld [vmem:[%s182] sm:$0xff]
  %s184 = scalar_lea.vmem %s1, 256
  %v185 = vld [vmem:[%s184] sm:$0xff]
  %s186 = scalar_lea.vmem %s1, 264
  %v187 = vld [vmem:[%s186] sm:$0xff]
  %s188 = scalar_lea.vmem %s1, 272
  %v189 = vld [vmem:[%s188] sm:$0xff]
  %s190 = scalar_lea.vmem %s1, 280
  %v191 = vld [vmem:[%s190] sm:$0xff]
  %v192 = vmul.f32 %v11, %v175
  %v193 = vmul.f32 %v13, %v181
  %v194 = vadd.f32 %v192, %v193
  %v195 = vmul.f32 %v15, %v187
  %v196 = vadd.f32 %v194, %v195
  %v197 = vmul.f32 %v17, %v177
  %v198 = vadd.f32 %v196, %v197
  %v199 = vmul.f32 %v19, %v183
  %v200 = vadd.f32 %v198, %v199
  %v201 = vmul.f32 %v21, %v189
  %v202 = vadd.f32 %v200, %v201
  %v203 = vmul.f32 %v23, %v179
  %v204 = vadd.f32 %v202, %v203
  %v205 = vmul.f32 %v25, %v185
  %v206 = vadd.f32 %v204, %v205
  %v207 = vmul.f32 %v27, %v191
  %v208 = vadd.f32 %v206, %v207
  %v209 = vadd.f32 %v175, %v183
  %v210 = vadd.f32 %v209, %v191
  %v211 = vmul.f32 %v49, %v210
  %s212 = scalar_lea.vmem %s2, 48
  %213 = vst [vmem:[%s212] sm:$0xff] %v208
  %s214 = scalar_lea.vmem %s2, 56
  %215 = vst [vmem:[%s214] sm:$0xff] %v211
  // Predicated region
  $region10: #{generalized_invariants.1} parent=0 // pred_check
    _
  $region11: #{generalized_invariants.1} parent=0 // pred_check_branch
    %217 = sbr.rel (0) target = $region13
  $region12: #{generalized_invariants.1} parent=0 // pred_region
    _
  $region13: #{generalized_invariants.1} parent=0 // pred_fallthru
    _
  // Predicated region
  $region14: #{generalized_invariants.1} parent=0 // pred_check
    _
  $region15: #{generalized_invariants.1} parent=0 // pred_check_branch
    %219 = sbr.rel (0) target = $region17
  $region16: #{generalized_invariants.1} parent=0 // pred_region
    _
  $region17: #{generalized_invariants.1} parent=0 // pred_fallthru
    _

</llo_original>
